<compile_context>
chip_gen: v5e
topology: v5e:2x2
jax: 0.10.0
libtpu: 0.0.40
codegen_flags: <defaults>
</compile_context>

<pallas_src>
import functools
import math

import jax
import jax.numpy as jnp
from jax.experimental import pallas as pl
from jax.experimental.pallas import tpu as pltpu


# --------------------------------------------------------------------------- #
# helpers
# --------------------------------------------------------------------------- #
def _round_up(v, m):
    return ((v + m - 1) // m) * m


def _padded_hidden(hsz):
    # Lane-dense output width.  256-aligned for the 2x256x256 MXU on v6e/v7x
    # when H > 128 (128-aligned is already fine on v5e's 128x128 MXU).
    return 128 if hsz <= 128 else _round_up(hsz, 256)


def _select_tiles(n, hp):
    # Batch (sublane) tiling.
    if n <= 512:
        tile_n = _round_up(max(n, 1), 8)
        np_ = tile_n
    else:
        tile_n = 256
        np_ = _round_up(n, tile_n)
    # Hidden (lane) tiling: lane-dense, and >= 2 blocks when Hp >= 256 so both
    # v7x TensorCores get work on the parallel axes.
    if hp >= 1024:
        tile_h = 512
    elif hp >= 256:
        tile_h = hp // 2          # hp is a multiple of 256 here -> tile_h % 128 == 0
    else:
        tile_h = hp               # hp == 128
    return tile_n, np_, tile_h


def _vmem_estimate(tile_n, tile_h, in_sz, hsz, act_bytes, w_bytes, track):
    in_blk = (tile_n * in_sz * act_bytes          # x tile
              + tile_n * hsz * act_bytes          # h tile
              + in_sz * tile_h * w_bytes          # W_ih panel
              + hsz * tile_h * w_bytes            # W_lat panel
              + tile_h * 4)                       # bias
    out_blk = tile_n * tile_h * 4 * (2 if track else 1)
    return 2 * (in_blk + out_blk)                 # double buffering


# --------------------------------------------------------------------------- #
# parameter preparation (constant work hoisted out of the per-step call)
# --------------------------------------------------------------------------- #
def prepare_rnnc_params(weight_ih, weight_lat, bias, *, use_bf16=False):
    """Pad (and optionally cast) the constant weights ONCE.

    weight_ih : (input_size, hidden_size)
    weight_lat: (hidden_size, hidden_size)
    bias      : (1, hidden_size)
    Returns (wih_p, wlat_p, bias_p) with the hidden dim zero-padded to a
    lane-dense multiple; pass these to rnnc_forward / rnnc_forward_seq.
    use_bf16=True casts weights to bfloat16 (numerics-approved fast path).
    """
    in_sz, hsz = weight_ih.shape
    hp = _padded_hidden(hsz)
    w_dtype = jnp.bfloat16 if use_bf16 else weight_ih.dtype
    wih_p = jnp.pad(weight_ih, ((0, 0), (0, hp - hsz))).astype(w_dtype)
    wlat_p = jnp.pad(weight_lat, ((0, 0), (0, hp - hsz))).astype(w_dtype)
    bias_p = jnp.pad(bias, ((0, 0), (0, hp - hsz))).astype(jnp.float32)
    return wih_p, wlat_p, bias_p


# --------------------------------------------------------------------------- #
# single-step kernel
# --------------------------------------------------------------------------- #
def _step_compute(x_ref, h_ref, wih_ref, wlat_ref, b_ref):
    w_dtype = wih_ref.dtype
    x_v = x_ref[...]
    h_v = h_ref[...]
    if x_v.dtype != w_dtype:
        x_v = x_v.astype(w_dtype)
    if h_v.dtype != w_dtype:
        h_v = h_v.astype(w_dtype)
    pre = jnp.dot(x_v, wih_ref[...], preferred_element_type=jnp.float32)
    pre = pre + jnp.dot(h_v, wlat_ref[...], preferred_element_type=jnp.float32)
    pre = pre + b_ref[...]          # (1, tile_h) broadcasts over rows
    return pre


def _rnnc_step_track(x_ref, h_ref, wih_ref, wlat_ref, b_ref, out_ref, hid_ref):
    pre = _step_compute(x_ref, h_ref, wih_ref, wlat_ref, b_ref)
    hid_ref[...] = pre.astype(hid_ref.dtype)
    out_ref[...] = jnp.tanh(pre).astype(out_ref.dtype)


def _rnnc_step_notrack(x_ref, h_ref, wih_ref, wlat_ref, b_ref, out_ref):
    pre = _step_compute(x_ref, h_ref, wih_ref, wlat_ref, b_ref)
    out_ref[...] = jnp.tanh(pre).astype(out_ref.dtype)


def _rnnc_forward_impl(x, hidden, hidden_delayed, wih_p, wlat_p, bias_p,
                       track=True):
    """Single-timestep RNNC forward.

    x              : (N, input_size)
    hidden         : (N, hidden_size)
    hidden_delayed : (N, hidden_size) or None
    wih_p, wlat_p, bias_p : prepared params from prepare_rnnc_params()
    Returns (out, hidden_pre) if track else out.
    """
    h_in = hidden if hidden_delayed is None else hidden_delayed

    n, in_sz = x.shape
    hsz = h_in.shape[1]
    hp = wih_p.shape[1]
    assert wih_p.shape == (in_sz, hp)
    assert wlat_p.shape == (hsz, hp)
    assert bias_p.shape == (1, hp)
    out_dtype = x.dtype

    tile_n, np_, tile_h = _select_tiles(n, hp)

    # Only the (small) activations ever get a per-call pad, and only along N.
    if np_ != n:
        x = jnp.pad(x, ((0, np_ - n), (0, 0)))
        h_in = jnp.pad(h_in, ((0, np_ - n), (0, 0)))

    grid = (np_ // tile_n, hp // tile_h)

    in_specs = [
        pl.BlockSpec((tile_n, in_sz), lambda i, j: (i, 0)),   # x   (full K)
        pl.BlockSpec((tile_n, hsz), lambda i, j: (i, 0)),     # h   (full K)
        pl.BlockSpec((in_sz, tile_h), lambda i, j: (0, j)),   # W_ih panel
        pl.BlockSpec((hsz, tile_h), lambda i, j: (0, j)),     # W_lat panel
        pl.BlockSpec((1, tile_h), lambda i, j: (0, j)),       # bias
    ]
    out_tile_spec = pl.BlockSpec((tile_n, tile_h), lambda i, j: (i, j))

    est = _vmem_estimate(tile_n, tile_h, in_sz, hsz,
                         act_bytes=x.dtype.itemsize,
                         w_bytes=wih_p.dtype.itemsize,
                         track=track)
    vmem_limit = None
    if est > (16 << 20):
        # Leave headroom against v7x's tighter 64 MiB physical VMEM.
        vmem_limit = int(min(est + (8 << 20), 48 << 20))
    compiler_params = pltpu.CompilerParams(
        dimension_semantics=("parallel", "parallel"),
        vmem_limit_bytes=vmem_limit,
    )

    if track:
        out_p, hid_p = pl.pallas_call(
            _rnnc_step_track,
            out_shape=(
                jax.ShapeDtypeStruct((np_, hp), out_dtype),     # tanh(pre)
                jax.ShapeDtypeStruct((np_, hp), jnp.float32),   # pre-activation
            ),
            grid=grid,
            in_specs=in_specs,
            out_specs=(out_tile_spec, out_tile_spec),
            compiler_params=compiler_params,
        )(x, h_in, wih_p, wlat_p, bias_p)
        return out_p[:n, :hsz], hid_p[:n, :hsz]

    out_p = pl.pallas_call(
        _rnnc_step_notrack,
        out_shape=jax.ShapeDtypeStruct((np_, hp), out_dtype),
        grid=grid,
        in_specs=in_specs,
        out_specs=out_tile_spec,
        compiler_params=compiler_params,
    )(x, h_in, wih_p, wlat_p, bias_p)
    return out_p[:n, :hsz]


rnnc_forward = functools.partial(jax.jit, static_argnames=("track",))(
    _rnnc_forward_impl
)


# --------------------------------------------------------------------------- #
# whole-sequence kernel: weights stay VMEM-resident across timesteps
# (assumes the standard recurrence h_{t+1} = tanh(x_t @ W_ih + h_t @ W_lat + b))
# --------------------------------------------------------------------------- #
def _rnnc_seq_kernel(x_ref, h0_ref, wih_ref, wlat_ref, b_ref, out_ref, h_scr):
    t = pl.program_id(0)

    @pl.when(t == 0)
    def _():
        h_scr[...] = h0_ref[...].astype(jnp.float32)

    w_dtype = wih_ref.dtype
    x_v = x_ref[0]
    if x_v.dtype != w_dtype:
        x_v = x_v.astype(w_dtype)
    h_v = h_scr[...]
    if h_v.dtype != w_dtype:
        h_v = h_v.astype(w_dtype)

    pre = jnp.dot(x_v, wih_ref[...], preferred_element_type=jnp.float32)
    pre = pre + jnp.dot(h_v, wlat_ref[...], preferred_element_type=jnp.float32)
    pre = pre + b_ref[...]
    h_new = jnp.tanh(pre)
    h_scr[...] = h_new
    out_ref[0] = h_new.astype(out_ref.dtype)


def _rnnc_seq_impl(x_seq, h0, wih_p, wlat_p, bias_p):
    """Run the cell over a whole sequence inside one pallas_call.

    x_seq : (T, N, input_size), h0 : (N, hidden_size).
    Returns out_seq (T, N, hidden_size) with out[t] = h_{t+1}.
    """
    t_len, n, in_sz = x_seq.shape
    hsz = h0.shape[1]
    hp = wih_p.shape[1]
    np_ = _round_up(max(n, 1), 8)
    out_dtype = x_seq.dtype

    # One-time (per sequence) pads, amortized over T steps:
    if np_ != n:
        x_seq = jnp.pad(x_seq, ((0, 0), (0, np_ - n), (0, 0)))
    h0_p = jnp.pad(h0, ((0, np_ - n), (0, hp - hsz)))
    # Row-pad W_lat so it matches the Hp-wide carried hidden state (zero rows
    # + zero-padded bias => padded hidden columns stay exactly 0).
    wlat_sq = jnp.pad(wlat_p, ((0, hp - wlat_p.shape[0]), (0, 0)))

    # TODO(synk): tile N / H inside the sequence kernel for very large hidden
    # sizes where the resident (Hp, Hp) lateral panel would overflow VMEM.
    out_p = pl.pallas_call(
        _rnnc_seq_kernel,
        out_shape=jax.ShapeDtypeStruct((t_len, np_, hp), out_dtype),
        grid=(t_len,),
        in_specs=[
            pl.BlockSpec((1, np_, in_sz), lambda t: (t, 0, 0)),  # x_t (streamed)
            pl.BlockSpec((np_, hp), lambda t: (0, 0)),           # h0 (loaded once)
            pl.BlockSpec((in_sz, hp), lambda t: (0, 0)),         # W_ih (resident)
            pl.BlockSpec((hp, hp), lambda t: (0, 0)),            # W_lat (resident)
            pl.BlockSpec((1, hp), lambda t: (0, 0)),             # bias (resident)
        ],
        out_specs=pl.BlockSpec((1, np_, hp), lambda t: (t, 0, 0)),
        scratch_shapes=[pltpu.VMEM((np_, hp), jnp.float32)],     # hidden carry
        compiler_params=pltpu.CompilerParams(
            dimension_semantics=("arbitrary",),
        ),
    )(x_seq, h0_p, wih_p, wlat_sq, bias_p)
    return out_p[:, :n, :hsz]


rnnc_forward_seq = jax.jit(_rnnc_seq_impl)


# --------------------------------------------------------------------------- #
# module-parity helpers
# --------------------------------------------------------------------------- #
def init_rnnc_params(key, input_size, hidden_size, bias=True):
    """Deterministic parameter init matching the PyTorch module's __init__."""
    bound = math.sqrt(1.0 / hidden_size)
    k_ih, k_lat, k_b = jax.random.split(key, 3)
    weight_ih = jax.random.uniform(
        k_ih, (input_size, hidden_size), jnp.float32, -bound, bound
    )
    weight_lat = jax.random.uniform(
        k_lat, (hidden_size, hidden_size), jnp.float32, -bound, bound
    )
    if bias:
        bias_p = jax.random.uniform(k_b, (1, hidden_size), jnp.float32, -bound, bound)
    else:
        bias_p = jnp.zeros((1, hidden_size), jnp.float32)
    return weight_ih, weight_lat, bias_p


def init_states(batch_size, hidden_size):
    firing = jnp.zeros((batch_size, hidden_size), jnp.float32)
    voltage = jnp.zeros((batch_size, hidden_size), jnp.float32)
    return firing, voltage


# --------------------------------------------------------------------------- #
# demo / correctness checks
# --------------------------------------------------------------------------- #
if __name__ == "__main__":
    INPUT_SIZE = 16
    HIDDEN_SIZE = 32
    BATCH = 8
    SEQ_LEN = 8

    key = jax.random.PRNGKey(0)
    k_params, k_x, k_h, k_hd, k_seq = jax.random.split(key, 5)

    weight_ih, weight_lat, bias = init_rnnc_params(
        k_params, INPUT_SIZE, HIDDEN_SIZE, bias=True
    )
    # Constant-weight prep (lane-dense padding) happens ONCE, outside the step.
    wih_p, wlat_p, bias_p = prepare_rnnc_params(weight_ih, weight_lat, bias)

    x = jax.random.normal(k_x, (BATCH, INPUT_SIZE), jnp.float32)
    hidden = jax.random.normal(k_h, (BATCH, HIDDEN_SIZE), jnp.float32)
    hidden_delayed = jax.random.normal(k_hd, (BATCH, HIDDEN_SIZE), jnp.float32)

    # --- single step, hidden_delayed provided, track=True ---
    out, hid_pre = rnnc_forward(
        x, hidden, hidden_delayed, wih_p, wlat_p, bias_p, track=True
    )
    out = jax.block_until_ready(out)
    hid_pre = jax.block_until_ready(hid_pre)

    ref_pre = x @ weight_ih + hidden_delayed @ weight_lat + bias
    ref_out = jnp.tanh(ref_pre)
    assert out.shape == (BATCH, HIDDEN_SIZE) and hid_pre.shape == (BATCH, HIDDEN_SIZE)
    assert jnp.allclose(out, ref_out, atol=1e-5), "out mismatch"
    assert jnp.allclose(hid_pre, ref_pre, atol=1e-5), "pre-activation mismatch"

    # --- single step, hidden_delayed=None (uses `hidden`), track=False ---
    out2 = jax.block_until_ready(
        rnnc_forward(x, hidden, None, wih_p, wlat_p, bias_p, track=False)
    )
    ref_pre2 = x @ weight_ih + hidden @ weight_lat + bias
    assert jnp.allclose(out2, jnp.tanh(ref_pre2), atol=1e-5), "no-delay path mismatch"

    # --- odd shapes: exercises N padding + a 2-block H grid (v7x megacore) ---
    IN2, H2, B2 = 24, 320, 20
    k2p, k2x, k2h = jax.random.split(jax.random.PRNGKey(1), 3)
    w_ih2, w_lat2, b2 = init_rnnc_params(k2p, IN2, H2, bias=True)
    params2 = prepare_rnnc_params(w_ih2, w_lat2, b2)
    x2 = jax.random.normal(k2x, (B2, IN2), jnp.float32)
    h2 = jax.random.normal(k2h, (B2, H2), jnp.float32)
    o3, p3 = rnnc_forward(x2, h2, None, *params2, track=True)
    o3 = jax.block_until_ready(o3)
    rp3 = x2 @ w_ih2 + h2 @ w_lat2 + b2
    assert jnp.allclose(p3, rp3, atol=1e-4), "padded-shape pre mismatch"
    assert jnp.allclose(o3, jnp.tanh(rp3), atol=1e-4), "padded-shape out mismatch"

    # --- bf16 weights/compute (numerics-approved fast path, f32 accumulation) ---
    params_bf16 = prepare_rnnc_params(weight_ih, weight_lat, bias, use_bf16=True)
    out_bf = jax.block_until_ready(
        rnnc_forward(x, hidden, hidden_delayed, *params_bf16, track=False)
    )
    assert jnp.allclose(out_bf, ref_out, atol=0.1, rtol=0.1), "bf16 path diverged"

    # --- whole-sequence kernel: weights VMEM-resident across timesteps ---
    x_seq = jax.random.normal(k_seq, (SEQ_LEN, BATCH, INPUT_SIZE), jnp.float32)
    h0 = jnp.zeros((BATCH, HIDDEN_SIZE), jnp.float32)
    outs = jax.block_until_ready(rnnc_forward_seq(x_seq, h0, wih_p, wlat_p, bias_p))

    def ref_step(h, xt):
        hn = jnp.tanh(xt @ weight_ih + h @ weight_lat + bias)
        return hn, hn

    _, ref_outs = jax.lax.scan(ref_step, h0, x_seq)
    assert outs.shape == (SEQ_LEN, BATCH, HIDDEN_SIZE)
    assert jnp.allclose(outs, ref_outs, atol=1e-5), "sequence kernel mismatch"

    print("KERNEL_OK")
</pallas_src>

<mosaic_0001>
module attributes {stable_mosaic.version = 11 : i64} {
  func.func @_rnnc_step_track(%arg0: i32, %arg1: i32, %arg2: memref<8x16xf32, #tpu.memory_space<vmem>>, %arg3: memref<8x32xf32, #tpu.memory_space<vmem>>, %arg4: memref<16x128xf32, #tpu.memory_space<vmem>>, %arg5: memref<32x128xf32, #tpu.memory_space<vmem>>, %arg6: memref<1x128xf32, #tpu.memory_space<vmem>>, %arg7: memref<8x128xf32, #tpu.memory_space<vmem>>, %arg8: memref<8x128xf32, #tpu.memory_space<vmem>>) attributes {dimension_semantics = [#tpu.dimension_semantics<parallel>, #tpu.dimension_semantics<parallel>], iteration_bounds = array<i64: 1, 1>, scalar_prefetch = 0 : i64, scratch_operands = 0 : i64, tpu.core_type = #tpu.core_type<tc>, window_params = [{transform_indices = @transform_0, window_bounds = array<i64: 8, 16>}, {transform_indices = @transform_1, window_bounds = array<i64: 8, 32>}, {transform_indices = @transform_2, window_bounds = array<i64: 16, 128>}, {transform_indices = @transform_3, window_bounds = array<i64: 32, 128>}, {transform_indices = @transform_4, window_bounds = array<i64: 1, 128>}, {transform_indices = @transform_5, window_bounds = array<i64: 8, 128>}, {transform_indices = @transform_6, window_bounds = array<i64: 8, 128>}]} {
    %c0 = arith.constant 0 : index
    %c0_0 = arith.constant 0 : index
    %0 = vector.load %arg2[%c0, %c0_0] : memref<8x16xf32, #tpu.memory_space<vmem>>, vector<8x16xf32>
    %c0_1 = arith.constant 0 : index
    %c0_2 = arith.constant 0 : index
    %1 = vector.load %arg3[%c0_1, %c0_2] : memref<8x32xf32, #tpu.memory_space<vmem>>, vector<8x32xf32>
    %c0_3 = arith.constant 0 : index
    %c0_4 = arith.constant 0 : index
    %2 = vector.load %arg4[%c0_3, %c0_4] : memref<16x128xf32, #tpu.memory_space<vmem>>, vector<16x128xf32>
    %cst = arith.constant dense<0.000000e+00> : vector<8x128xf32>
    %3 = tpu.matmul %0, %2, %cst {dimension_numbers = #tpu.dot_dimension_numbers<[1], [0], [0], [1], [0, 0, 1, 1], [], []>} : vector<8x16xf32>, vector<16x128xf32>, vector<8x128xf32> -> vector<8x128xf32>
    %c0_5 = arith.constant 0 : index
    %c0_6 = arith.constant 0 : index
    %4 = vector.load %arg5[%c0_5, %c0_6] : memref<32x128xf32, #tpu.memory_space<vmem>>, vector<32x128xf32>
    %cst_7 = arith.constant dense<0.000000e+00> : vector<8x128xf32>
    %5 = tpu.matmul %1, %4, %cst_7 {dimension_numbers = #tpu.dot_dimension_numbers<[1], [0], [0], [1], [0, 0, 1, 1], [], []>} : vector<8x32xf32>, vector<32x128xf32>, vector<8x128xf32> -> vector<8x128xf32>
    %6 = arith.addf %3, %5 : vector<8x128xf32>
    %c0_8 = arith.constant 0 : index
    %c0_9 = arith.constant 0 : index
    %7 = vector.load %arg6[%c0_8, %c0_9] : memref<1x128xf32, #tpu.memory_space<vmem>>, vector<1x128xf32>
    %8 = vector.broadcast %7 : vector<1x128xf32> to vector<8x128xf32>
    %9 = arith.addf %6, %8 : vector<8x128xf32>
    %c0_10 = arith.constant 0 : index
    %c0_11 = arith.constant 0 : index
    %10 = vector.load %arg8[%c0_10, %c0_11] : memref<8x128xf32, #tpu.memory_space<vmem>>, vector<8x128xf32>
    tpu.vector_store %arg8[%c0_10, %c0_11], %9 {strides = array<i32>} : memref<8x128xf32, #tpu.memory_space<vmem>>, vector<8x128xf32>,
    %11 = math.tanh %9 : vector<8x128xf32>
    %c0_12 = arith.constant 0 : index
    %c0_13 = arith.constant 0 : index
    %12 = vector.load %arg7[%c0_12, %c0_13] : memref<8x128xf32, #tpu.memory_space<vmem>>, vector<8x128xf32>
    tpu.vector_store %arg7[%c0_12, %c0_13], %11 {strides = array<i32>} : memref<8x128xf32, #tpu.memory_space<vmem>>, vector<8x128xf32>,
    return
  }
  func.func @transform_0(%arg0: i32, %arg1: i32) -> (i32, i32) {
    %c0_i32 = arith.constant 0 : i32
    %c0_i32_0 = arith.constant 0 : i32
    return %arg0, %c0_i32 : i32, i32
  }
  func.func @transform_1(%arg0: i32, %arg1: i32) -> (i32, i32) {
    %c0_i32 = arith.constant 0 : i32
    %c0_i32_0 = arith.constant 0 : i32
    return %arg0, %c0_i32 : i32, i32
  }
  func.func @transform_2(%arg0: i32, %arg1: i32) -> (i32, i32) {
    %c0_i32 = arith.constant 0 : i32
    %c0_i32_0 = arith.constant 0 : i32
    return %c0_i32, %arg1 : i32, i32
  }
  func.func @transform_3(%arg0: i32, %arg1: i32) -> (i32, i32) {
    %c0_i32 = arith.constant 0 : i32
    %c0_i32_0 = arith.constant 0 : i32
    return %c0_i32, %arg1 : i32, i32
  }
  func.func @transform_4(%arg0: i32, %arg1: i32) -> (i32, i32) {
    %c0_i32 = arith.constant 0 : i32
    %c0_i32_0 = arith.constant 0 : i32
    return %c0_i32, %arg1 : i32, i32
  }
  func.func @transform_5(%arg0: i32, %arg1: i32) -> (i32, i32) {
    %c0_i32 = arith.constant 0 : i32
    return %arg0, %arg1 : i32, i32
  }
  func.func @transform_6(%arg0: i32, %arg1: i32) -> (i32, i32) {
    %c0_i32 = arith.constant 0 : i32
    return %arg0, %arg1 : i32, i32
  }
}

</mosaic_0001>

<llo_original>
// kernel: _rnnc_forward_impl.1
$region0: #{_rnnc_forward_impl.1}
  #allocation0 [shape = 'u32[]', space=smem, size = 0x4, offset = 0x4, fixed_abs, tag = 'smem constant byte address 0x4 - core index']
  #allocation1 [shape = 'u32[72,128]{1,0:T(1,128)}', space=vmem, size = 0x9000, scoped, tag = 'internal scratch']
  %s0 = inlined_call_operand.hbm [shape: f32[8,16], index: 0, kind: input, shape index: {}]
  %s1 = inlined_call_operand.hbm [shape: f32[8,32], index: 1, kind: input, shape index: {}]
  %s2 = inlined_call_operand.hbm [shape: f32[16,128], index: 2, kind: input, shape index: {}]
  %s3 = inlined_call_operand.hbm [shape: f32[32,128], index: 3, kind: input, shape index: {}]
  %s4 = inlined_call_operand.vmem [shape: f32[1,128], index: 4, kind: input, shape index: {}]
  %s5 = inlined_call_operand.hbm [shape: f32[8,128], index: 5, kind: output, shape index: {0}]
  %s6 = inlined_call_operand.hbm [shape: f32[8,128], index: 6, kind: output, shape index: {1}]
  %7 = xla_tuple %s5, %s6
  %s8 = sld [smem:[#allocation0]]
  $region54: #{_rnnc_forward_impl.1} parent=0
    _
  %s10 = ssub.s32 1, %s8
  %s11 = scalar_select 0, %s10, %s8
  $region1: #{_rnnc_forward_impl.1} parent=0
    #allocation2 [shape = 'u8[4096]{0}', space=vmem, size = 0x1000, scoped, tag = 'input window, operand 0, single buffered']
    #allocation3 [shape = 's32[1]{0}', space=sflag, size = 0x4, scoped, tag = 'scoped memory for _rnnc_forward_impl.1']
    #allocation4 [shape = 's32[1]{0}', space=sflag, size = 0x4, scoped, tag = 'scoped memory for _rnnc_forward_impl.1']
    #allocation5 [shape = 'u8[4096]{0}', space=vmem, size = 0x1000, scoped, tag = 'input window, operand 1, single buffered']
    #allocation6 [shape = 's32[1]{0}', space=sflag, size = 0x4, scoped, tag = 'scoped memory for _rnnc_forward_impl.1']
    #allocation7 [shape = 'u8[8192]{0}', space=vmem, size = 0x2000, scoped, tag = 'input window, operand 2, single buffered']
    #allocation8 [shape = 'u8[16384]{0}', space=vmem, size = 0x4000, scoped, tag = 'input window, operand 3, single buffered']
    #allocation9 [shape = 's32[1]{0}', space=sflag, size = 0x4, scoped, tag = 'scoped memory for _rnnc_forward_impl.1']
    #allocation10 [shape = 'u8[4096]{0}', space=vmem, size = 0x1000, scoped, tag = 'output window, operand 0, single buffered']
    #allocation11 [shape = 'u8[4096]{0}', space=vmem, size = 0x1000, scoped, tag = 'output window, operand 1, single buffered']
    #allocation12 [shape = 's32[1]{0}', space=sflag, size = 0x4, scoped, tag = 'scoped memory for _rnnc_forward_impl.1']
    %12 = vsyncpa [#allocation3], 0
    %13 = vsyncpa [#allocation6], 0
    %14 = vsyncpa [#allocation9], 0
    %15 = vsyncpa [#allocation4], 0
    %16 = vsyncpa [#allocation12], 0
    // Predicated region
    $region2: #{_rnnc_forward_impl.1} parent=1 // pred_check
      _
    $region3: #{_rnnc_forward_impl.1} parent=1 // pred_check_branch
      %18 = sbr.rel (0) target = $region5
    $region4: #{_rnnc_forward_impl.1} parent=1 // pred_region
      %20 = vsyncadd [#allocation3], 0
      %s22 = sshll.u32 %s0, 4
      %s23 = int_to_ptr.hbm [resolvable:$true] %s22
      %s24 = sshll.u32 [#allocation2], 4
      %s25 = int_to_ptr.vmem [resolvable:$true] %s24
      %27 = dma.hbm_to_vmem [thread:$0]  %s23, 128, %s25, [#allocation3]
    $region5: #{_rnnc_forward_impl.1} parent=1 // pred_fallthru
      _
    // Predicated region
    $region6: #{_rnnc_forward_impl.1} parent=1 // pred_check
      _
    $region7: #{_rnnc_forward_impl.1} parent=1 // pred_check_branch
      %29 = sbr.rel (0) target = $region9
    $region8: #{_rnnc_forward_impl.1} parent=1 // pred_region
      %31 = vsyncadd [#allocation6], 0
      %s33 = sshll.u32 %s1, 4
      %s34 = int_to_ptr.hbm [resolvable:$true] %s33
      %s35 = sshll.u32 [#allocation5], 4
      %s36 = int_to_ptr.vmem [resolvable:$true] %s35
      %38 = dma.hbm_to_vmem [thread:$0]  %s34, 128, %s36, [#allocation6]
    $region9: #{_rnnc_forward_impl.1} parent=1 // pred_fallthru
      _
    // Predicated region
    $region10: #{_rnnc_forward_impl.1} parent=1 // pred_check
      _
    $region11: #{_rnnc_forward_impl.1} parent=1 // pred_check_branch
      %40 = sbr.rel (0) target = $region13
    $region12: #{_rnnc_forward_impl.1} parent=1 // pred_region
      %42 = vsyncadd [#allocation6], 0
      %s43 = sshll.u32 %s2, 4
      %s44 = int_to_ptr.hbm [resolvable:$true] %s43
      %s45 = sshll.u32 [#allocation7], 4
      %s46 = int_to_ptr.vmem [resolvable:$true] %s45
      %51 = dma.hbm_to_vmem [thread:$0]  %s44, 256, %s46, [#allocation6], 128, 128, 8
    $region13: #{_rnnc_forward_impl.1} parent=1 // pred_fallthru
      _
    // Predicated region
    $region14: #{_rnnc_forward_impl.1} parent=1 // pred_check
      _
    $region15: #{_rnnc_forward_impl.1} parent=1 // pred_check_branch
      %53 = sbr.rel (0) target = $region17
    $region16: #{_rnnc_forward_impl.1} parent=1 // pred_region
      %55 = vsyncadd [#allocation9], 0
      %s56 = sshll.u32 %s3, 4
      %s57 = int_to_ptr.hbm [resolvable:$true] %s56
      %s58 = sshll.u32 [#allocation8], 4
      %s59 = int_to_ptr.vmem [resolvable:$true] %s58
      %64 = dma.hbm_to_vmem [thread:$0]  %s57, 512, %s59, [#allocation9], 128, 128, 8
    $region17: #{_rnnc_forward_impl.1} parent=1 // pred_fallthru
      _
    // Predicated region
    $region18: #{_rnnc_forward_impl.1} parent=1 // pred_check
      _
    $region19: #{_rnnc_forward_impl.1} parent=1 // pred_check_branch
      %66 = sbr.rel (0) target = $region21
    $region20: #{_rnnc_forward_impl.1} parent=1 // pred_region
      _
    $region21: #{_rnnc_forward_impl.1} parent=1 // pred_fallthru
      _
    // Predicated region
    $region22: #{_rnnc_forward_impl.1} parent=1 // pred_check
      _
    $region23: #{_rnnc_forward_impl.1} parent=1 // pred_check_branch
      %68 = sbr.rel (0) target = $region25
    $region24: #{_rnnc_forward_impl.1} parent=1 // pred_region
      %70 = dma.done [#allocation3], 128
    $region25: #{_rnnc_forward_impl.1} parent=1 // pred_fallthru
      _
    // Predicated region
    $region26: #{_rnnc_forward_impl.1} parent=1 // pred_check
      _
    $region27: #{_rnnc_forward_impl.1} parent=1 // pred_check_branch
      %72 = sbr.rel (0) target = $region29
    $region28: #{_rnnc_forward_impl.1} parent=1 // pred_region
      %74 = dma.done [#allocation6], 128
    $region29: #{_rnnc_forward_impl.1} parent=1 // pred_fallthru
      _
    // Predicated region
    $region30: #{_rnnc_forward_impl.1} parent=1 // pred_check
      _
    $region31: #{_rnnc_forward_impl.1} parent=1 // pred_check_branch
      %76 = sbr.rel (0) target = $region33
    $region32: #{_rnnc_forward_impl.1} parent=1 // pred_region
      %78 = dma.done [#allocation6], 256
    $region33: #{_rnnc_forward_impl.1} parent=1 // pred_fallthru
      _
    // Predicated region
    $region34: #{_rnnc_forward_impl.1} parent=1 // pred_check
      _
    $region35: #{_rnnc_forward_impl.1} parent=1 // pred_check_branch
      %80 = sbr.rel (0) target = $region37
    $region36: #{_rnnc_forward_impl.1} parent=1 // pred_region
      %82 = dma.done [#allocation9], 512
    $region37: #{_rnnc_forward_impl.1} parent=1 // pred_fallthru
      _
    %v83 = vld [vmem:[#allocation2] sm:$0xff]
    %v84 = vld [vmem:[#allocation5] sm:$0xff]
    %v85 = vld [vmem:[#allocation7] sm:$0xff]
    %v86 = vld [vmem:[#allocation7 + $0x8] sm:$0xff]
    %v87 = vld [vmem:[#allocation8] sm:$0xff]
    %v88 = vld [vmem:[#allocation8 + $0x8] sm:$0xff]
    %v89 = vld [vmem:[#allocation8 + $0x10] sm:$0xff]
    %v90 = vld [vmem:[#allocation8 + $0x18] sm:$0xff]
    %vm91 = vcmask 261120
    %v93 = vsel %vm91, %v84, 0
    %95 = vmatpush.msra.mxu0 0.0
    %96 = vmatpush.msra.mxu0 0.0
    %97 = vmatpush.msra.mxu0 0.0
    %98 = vmatpush.msra.mxu0 0.0
    %99 = vmatpush.msra.mxu0 0.0
    %100 = vmatpush.msra.mxu0 0.0
    %101 = vmatpush.msra.mxu0 0.0
    %102 = vmatpush.msra.mxu0 0.0
    %103 = vmatpush.msra.mxu0 0.0
    %104 = vmatpush.msra.mxu0 0.0
    %105 = vmatpush.msra.mxu0 0.0
    %106 = vmatpush.msra.mxu0 0.0
    %107 = vmatpush.msra.mxu0 %v90
    %108 = vmatpush.msra.mxu0 %v89
    %109 = vmatpush.msra.mxu0 %v88
    %110 = vmatpush.msra.mxu0 %v87
    %111 = vmatmul.f32.gmra.mxu0 %v93
    %v112 = vpop.f32.mrf.mxu0
    %v113 = vadd.f32 0.0, %v112
    %114 = vdwg.mxu0
    %vm115 = vcmask 130048
    %v117 = vsel %vm115, %v83, 0
    %119 = vmatpush.msra.mxu0 0.0
    %120 = vmatpush.msra.mxu0 0.0
    %121 = vmatpush.msra.mxu0 0.0
    %122 = vmatpush.msra.mxu0 0.0
    %123 = vmatpush.msra.mxu0 0.0
    %124 = vmatpush.msra.mxu0 0.0
    %125 = vmatpush.msra.mxu0 0.0
    %126 = vmatpush.msra.mxu0 0.0
    %127 = vmatpush.msra.mxu0 0.0
    %128 = vmatpush.msra.mxu0 0.0
    %129 = vmatpush.msra.mxu0 0.0
    %130 = vmatpush.msra.mxu0 0.0
    %131 = vmatpush.msra.mxu0 0.0
    %132 = vmatpush.msra.mxu0 0.0
    %133 = vmatpush.msra.mxu0 %v86
    %134 = vmatpush.msra.mxu0 %v85
    %135 = vmatmul.f32.gmra.mxu0 %v117
    %v136 = vpop.f32.mrf.mxu0
    %v137 = vadd.f32 %v113, %v136
    %138 = vdwg.mxu0
    %v139 = vld [vmem:[%s4] sm:$0x1]
    %v141 = vperm.slane %v139, 0
    %v143 = vadd.f32 %v137, %v141
    %144 = vst [vmem:[#allocation11] sm:$0xff] %v143
    %v145 = vtanh.pop %v143
    %146 = vst [vmem:[#allocation10] sm:$0xff] %v145
    // Predicated region
    $region38: #{_rnnc_forward_impl.1} parent=1 // pred_check
      _
    $region39: #{_rnnc_forward_impl.1} parent=1 // pred_check_branch
      %148 = sbr.rel (0) target = $region41
    $region40: #{_rnnc_forward_impl.1} parent=1 // pred_region
      %150 = vsyncadd [#allocation4], 0
      %s152 = sshll.u32 [#allocation10], 4
      %s153 = int_to_ptr.vmem [resolvable:$true] %s152
      %s154 = sshll.u32 %s5, 4
      %s155 = int_to_ptr.hbm [resolvable:$true] %s154
      %157 = dma.vmem_to_hbm [thread:$0]  %s153, 128, %s155, [#allocation4]
    $region41: #{_rnnc_forward_impl.1} parent=1 // pred_fallthru
      _
    // Predicated region
    $region42: #{_rnnc_forward_impl.1} parent=1 // pred_check
      _
    $region43: #{_rnnc_forward_impl.1} parent=1 // pred_check_branch
      %159 = sbr.rel (0) target = $region45
    $region44: #{_rnnc_forward_impl.1} parent=1 // pred_region
      %161 = vsyncadd [#allocation12], 0
      %s163 = sshll.u32 [#allocation11], 4
      %s164 = int_to_ptr.vmem [resolvable:$true] %s163
      %s165 = sshll.u32 %s6, 4
      %s166 = int_to_ptr.hbm [resolvable:$true] %s165
      %168 = dma.vmem_to_hbm [thread:$0]  %s164, 128, %s166, [#allocation12]
    $region45: #{_rnnc_forward_impl.1} parent=1 // pred_fallthru
      _
    // Predicated region
    $region46: #{_rnnc_forward_impl.1} parent=1 // pred_check
      _
    $region47: #{_rnnc_forward_impl.1} parent=1 // pred_check_branch
      %170 = sbr.rel (0) target = $region49
    $region48: #{_rnnc_forward_impl.1} parent=1 // pred_region
      %172 = dma.done [#allocation4], 128
    $region49: #{_rnnc_forward_impl.1} parent=1 // pred_fallthru
      _
    // Predicated region
    $region50: #{_rnnc_forward_impl.1} parent=1 // pred_check
      _
    $region51: #{_rnnc_forward_impl.1} parent=1 // pred_check_branch
      %174 = sbr.rel (0) target = $region53
    $region52: #{_rnnc_forward_impl.1} parent=1 // pred_region
      %176 = dma.done [#allocation12], 128
    $region53: #{_rnnc_forward_impl.1} parent=1 // pred_fallthru
      _
    %177 = vsyncpa [#allocation3], 1
    %178 = vsyncpa [#allocation6], 1
    %179 = vsyncpa [#allocation9], 1
    %180 = vsyncpa [#allocation4], 1
    %181 = vsyncpa [#allocation12], 1

</llo_original>
